<compile_context>
chip_gen: v7x
topology: tpu7x:2x2x1
jax: 0.10.0
libtpu: 0.0.40
codegen_flags: <defaults>
</compile_context>

<pallas_src>
import math
from functools import lru_cache

import jax
import jax.numpy as jnp
from jax.experimental import pallas as pl
from jax.experimental.pallas import tpu as pltpu


def _round_up(x, m):
    return ((x + m - 1) // m) * m


def _vmem_capacity_bytes():
    try:
        return int(pltpu.get_tpu_info().vmem_capacity_bytes)
    except Exception:
        return 64 << 20  # conservative fallback (v7x physical VMEM per TC)


def _choose_layout(n_elem, n_tasks, itemsize):
    """Pick a lane-dense 2D layout (rows, lanes) and a VMEM-budgeted row tile."""
    padded_n = _round_up(n_elem, 128)
    lanes = next(c for c in (1024, 512, 256, 128) if padded_n % c == 0)
    rows = padded_n // lanes

    # Packed sublane granularity: 8 (32-bit), 16 (16-bit), 32 (8-bit).
    gran = {4: 8, 2: 16, 1: 32}.get(itemsize, 8)

    # VMEM budget: (T inputs + 1 output) x 2 pipeline buffers per live tile.
    budget = min(_vmem_capacity_bytes() // 2, 48 << 20)
    bytes_per_row = (n_tasks + 1) * 2 * lanes * itemsize
    max_rows = max(gran, (budget // bytes_per_row) // gran * gran)
    tile_rows = min(1024, max_rows)

    if rows <= tile_rows:
        if rows > gran:
            # Split into >=2 grid steps so both v7x TensorCores get work.
            tile_rows = _round_up(pl.cdiv(rows, 2), gran)
        else:
            tile_rows = rows  # tiny tensor: single full-extent block is legal
    grid_rows = pl.cdiv(rows, tile_rows)
    pad_elems = padded_n - n_elem
    return rows, lanes, tile_rows, grid_rows, pad_elems


@lru_cache(maxsize=None)
def _build_dtp_forward(n_tasks, shape, dtype_name):
    """Jitted forward for a fixed (n_tasks, shape, dtype); weights are runtime args."""
    out_dtype = jnp.dtype(dtype_name)
    itemsize = out_dtype.itemsize
    n_elem = math.prod(shape)
    rows, lanes, tile_rows, grid_rows, pad_elems = _choose_layout(
        n_elem, n_tasks, itemsize
    )

    def kernel(w_ref, *refs):
        # w_ref: (T,) f32 in SMEM; refs = (x0, ..., x_{T-1}, out) VMEM tiles.
        x_refs, o_ref = refs[:-1], refs[-1]
        acc = w_ref[0] * x_refs[0][...].astype(jnp.float32)
        for t in range(1, n_tasks):
            acc = acc + w_ref[t] * x_refs[t][...].astype(jnp.float32)
        o_ref[...] = acc.astype(o_ref.dtype)

    vmem_spec = pl.BlockSpec((tile_rows, lanes), lambda i: (i, 0))
    smem_spec = pl.BlockSpec(memory_space=pltpu.MemorySpace.SMEM)

    footprint = (n_tasks + 1) * 2 * tile_rows * lanes * itemsize
    vmem_limit = min(
        max(int(footprint * 1.3) + (4 << 20), 16 << 20), _vmem_capacity_bytes()
    )

    call = pl.pallas_call(
        kernel,
        out_shape=jax.ShapeDtypeStruct((rows, lanes), out_dtype),
        grid=(grid_rows,),
        in_specs=[smem_spec] + [vmem_spec] * n_tasks,
        out_specs=vmem_spec,
        compiler_params=pltpu.CompilerParams(
            dimension_semantics=("parallel",),
            vmem_limit_bytes=vmem_limit,
        ),
    )

    @jax.jit
    def forward(w, *x):
        flat = [xi.reshape(-1) for xi in x]
        if pad_elems:
            flat = [jnp.pad(f, (0, pad_elems)) for f in flat]
        x2d = [f.reshape(rows, lanes) for f in flat]
        out = call(w, *x2d)
        if pad_elems:
            out = out.reshape(-1)[:n_elem]
        return out.reshape(shape)

    return forward


class DTPModuleJAX:
    """JAX/Pallas port of DTPModule. Metric scope is (0, 1]."""

    def __init__(self, metric_init, gamma):
        self.gamma = gamma
        self.update(metric_init)

    def update(self, metric):
        # Same formula/domain behavior as the PyTorch module (m == 0 raises).
        self.params = [-pow(1.0 - m, self.gamma) * math.log(m) for m in metric]
        # Weights live in a tiny device array -> update() never recompiles.
        self._w = jnp.asarray(self.params, dtype=jnp.float32)

    def __call__(self, *x):
        n_tasks = len(x)
        assert n_tasks == len(self.params), "inputs must match number of params"
        shape = tuple(x[0].shape)
        dtype = jnp.dtype(x[0].dtype)
        for xi in x:
            assert tuple(xi.shape) == shape, "all task losses must share a shape"
            assert jnp.dtype(xi.dtype) == dtype, "all task losses must share a dtype"
        fwd = _build_dtp_forward(n_tasks, shape, dtype.name)
        return fwd(self._w, *x)


if __name__ == "__main__":
    key = jax.random.PRNGKey(0)
    gamma = 2.0
    n_tasks = 3
    mod = DTPModuleJAX([0.3, 0.6, 0.9], gamma)

    keys = jax.random.split(key, 3 * n_tasks)

    # Test 1: f32, element count divisible by 128.
    B, C, H, W = 2, 4, 16, 16
    xs = [jax.random.uniform(keys[i], (B, C, H, W), dtype=jnp.float32)
          for i in range(n_tasks)]
    out = jax.block_until_ready(mod(*xs))
    ref = sum(p * xi for p, xi in zip(mod.params, xs))
    assert out.shape == (B, C, H, W)
    assert jnp.allclose(out, ref, atol=1e-5, rtol=1e-5), "mismatch vs reference"

    # Test 2: update() changes results without recompiling the kernel.
    mod.update([0.5, 0.5, 0.5])
    out2 = jax.block_until_ready(mod(*xs))
    ref2 = sum(p * xi for p, xi in zip(mod.params, xs))
    assert jnp.allclose(out2, ref2, atol=1e-5, rtol=1e-5), "mismatch after update()"

    # Test 3: odd element count (pad + unpad path), 3*5*7 = 105 elements.
    xs_odd = [jax.random.uniform(keys[n_tasks + i], (3, 5, 7), dtype=jnp.float32)
              for i in range(n_tasks)]
    out3 = jax.block_until_ready(mod(*xs_odd))
    ref3 = sum(p * xi for p, xi in zip(mod.params, xs_odd))
    assert out3.shape == (3, 5, 7)
    assert jnp.allclose(out3, ref3, atol=1e-5, rtol=1e-5), "mismatch on odd shape"

    # Test 4: bf16 inputs (packed sublane granularity path).
    xs_bf = [jax.random.uniform(keys[2 * n_tasks + i], (B, C, H, W)).astype(jnp.bfloat16)
             for i in range(n_tasks)]
    out4 = jax.block_until_ready(mod(*xs_bf))
    ref4 = sum(p * xi.astype(jnp.float32)
               for p, xi in zip(mod.params, xs_bf)).astype(jnp.bfloat16)
    assert out4.dtype == jnp.bfloat16
    assert jnp.allclose(out4.astype(jnp.float32), ref4.astype(jnp.float32),
                        atol=2e-2, rtol=2e-2), "mismatch on bf16"

    print("KERNEL_OK")
</pallas_src>

<mosaic_0001>
module attributes {stable_mosaic.version = 11 : i64} {
  func.func @kernel(%arg0: i32, %arg1: memref<3xf32, #tpu.memory_space<smem>>, %arg2: memref<2x1024xf32, #tpu.memory_space<vmem>>, %arg3: memref<2x1024xf32, #tpu.memory_space<vmem>>, %arg4: memref<2x1024xf32, #tpu.memory_space<vmem>>, %arg5: memref<2x1024xf32, #tpu.memory_space<vmem>>) attributes {dimension_semantics = [#tpu.dimension_semantics<parallel>], iteration_bounds = array<i64: 1>, scalar_prefetch = 0 : i64, scratch_operands = 0 : i64, tpu.core_type = #tpu.core_type<tc>, window_params = [{transform_indices = @transform_0, window_bounds = array<i64: 3>}, {transform_indices = @transform_1, window_bounds = array<i64: 2, 1024>}, {transform_indices = @transform_2, window_bounds = array<i64: 2, 1024>}, {transform_indices = @transform_3, window_bounds = array<i64: 2, 1024>}, {transform_indices = @transform_4, window_bounds = array<i64: 2, 1024>}]} {
    %c0 = arith.constant 0 : index
    %0 = memref.load %arg1[%c0] : memref<3xf32, #tpu.memory_space<smem>>
    %c0_0 = arith.constant 0 : index
    %c0_1 = arith.constant 0 : index
    %1 = vector.load %arg2[%c0_0, %c0_1] : memref<2x1024xf32, #tpu.memory_space<vmem>>, vector<2x1024xf32>
    %2 = vector.broadcast %0 : f32 to vector<2x1024xf32>
    %3 = arith.mulf %2, %1 : vector<2x1024xf32>
    %c1 = arith.constant 1 : index
    %4 = memref.load %arg1[%c1] : memref<3xf32, #tpu.memory_space<smem>>
    %c0_2 = arith.constant 0 : index
    %c0_3 = arith.constant 0 : index
    %5 = vector.load %arg3[%c0_2, %c0_3] : memref<2x1024xf32, #tpu.memory_space<vmem>>, vector<2x1024xf32>
    %6 = vector.broadcast %4 : f32 to vector<2x1024xf32>
    %7 = arith.mulf %6, %5 : vector<2x1024xf32>
    %8 = arith.addf %3, %7 : vector<2x1024xf32>
    %c2 = arith.constant 2 : index
    %9 = memref.load %arg1[%c2] : memref<3xf32, #tpu.memory_space<smem>>
    %c0_4 = arith.constant 0 : index
    %c0_5 = arith.constant 0 : index
    %10 = vector.load %arg4[%c0_4, %c0_5] : memref<2x1024xf32, #tpu.memory_space<vmem>>, vector<2x1024xf32>
    %11 = vector.broadcast %9 : f32 to vector<2x1024xf32>
    %12 = arith.mulf %11, %10 : vector<2x1024xf32>
    %13 = arith.addf %8, %12 : vector<2x1024xf32>
    %c0_6 = arith.constant 0 : index
    %c0_7 = arith.constant 0 : index
    %14 = vector.load %arg5[%c0_6, %c0_7] : memref<2x1024xf32, #tpu.memory_space<vmem>>, vector<2x1024xf32>
    tpu.vector_store %arg5[%c0_6, %c0_7], %13 {strides = array<i32>} : memref<2x1024xf32, #tpu.memory_space<vmem>>, vector<2x1024xf32>,
    return
  }
  func.func @transform_0(%arg0: i32) -> i32 {
    %c0_i32 = arith.constant 0 : i32
    %c0_i32_0 = arith.constant 0 : i32
    return %c0_i32 : i32
  }
  func.func @transform_1(%arg0: i32) -> (i32, i32) {
    %c0_i32 = arith.constant 0 : i32
    %c0_i32_0 = arith.constant 0 : i32
    return %arg0, %c0_i32 : i32, i32
  }
  func.func @transform_2(%arg0: i32) -> (i32, i32) {
    %c0_i32 = arith.constant 0 : i32
    %c0_i32_0 = arith.constant 0 : i32
    return %arg0, %c0_i32 : i32, i32
  }
  func.func @transform_3(%arg0: i32) -> (i32, i32) {
    %c0_i32 = arith.constant 0 : i32
    %c0_i32_0 = arith.constant 0 : i32
    return %arg0, %c0_i32 : i32, i32
  }
  func.func @transform_4(%arg0: i32) -> (i32, i32) {
    %c0_i32 = arith.constant 0 : i32
    %c0_i32_0 = arith.constant 0 : i32
    return %arg0, %c0_i32 : i32, i32
  }
}

</mosaic_0001>

<llo_original>
// kernel: forward.1
$region0: #{forward.1}
  #allocation0 [shape = 'u32[]', space=smem, size = 0x4, offset = 0x4, fixed_abs, tag = 'smem constant byte address 0x4 - core index']
  #allocation1 [shape = 'u32[144,128]{1,0:T(1,128)}', space=vmem, size = 0x12000, scoped, tag = 'internal scratch']
  %s0 = inlined_call_operand.vmem [shape: f32[3], index: 0, kind: input, shape index: {}]
  %s1 = inlined_call_operand.vmem [shape: f32[2,1024], index: 1, kind: input, shape index: {}]
  %s2 = inlined_call_operand.vmem [shape: f32[2,1024], index: 2, kind: input, shape index: {}]
  %s3 = inlined_call_operand.vmem [shape: f32[2,1024], index: 3, kind: input, shape index: {}]
  %s4 = inlined_call_operand.vmem [shape: f32[2,1024], index: 4, kind: output, shape index: {}]
  %s5 = sld [smem:[#allocation0]]
  $region30: #{forward.1} parent=0
    _
  %s7 = ssub.s32 1, %s5
  %s8 = scalar_select 0, %s7, %s5
  $region1: #{forward.1} parent=0
    #allocation2 [shape = 'u8[512]{0}', space=smem, size = 0x200, scoped, tag = 'input window, operand 0, single buffered']
    #allocation3 [shape = 's32[1]{0}', space=sflag, size = 0x4, scoped, tag = 'scoped memory for forward.1']
    %9 = vsyncpa [#allocation3], 0
    // Predicated region
    $region2: #{forward.1} parent=1 // pred_check
      _
    $region3: #{forward.1} parent=1 // pred_check_branch
      %11 = sbr.rel (0) target = $region5
    $region4: #{forward.1} parent=1 // pred_region
      %s13 = ssub.s32 16, 16
      %14 = vsyncadd [#allocation3], %s13
      %s16 = sshll.u32 %s0, 4
      %s17 = int_to_ptr.vmem [resolvable:$true] %s16
      %19 = dma.vmem_to_smem %s17, 16, [#allocation2], [#allocation3]
    $region5: #{forward.1} parent=1 // pred_fallthru
      _
    // Predicated region
    $region6: #{forward.1} parent=1 // pred_check
      _
    $region7: #{forward.1} parent=1 // pred_check_branch
      %21 = sbr.rel (0) target = $region9
    $region8: #{forward.1} parent=1 // pred_region
      _
    $region9: #{forward.1} parent=1 // pred_fallthru
      _
    // Predicated region
    $region10: #{forward.1} parent=1 // pred_check
      _
    $region11: #{forward.1} parent=1 // pred_check_branch
      %23 = sbr.rel (0) target = $region13
    $region12: #{forward.1} parent=1 // pred_region
      _
    $region13: #{forward.1} parent=1 // pred_fallthru
      _
    // Predicated region
    $region14: #{forward.1} parent=1 // pred_check
      _
    $region15: #{forward.1} parent=1 // pred_check_branch
      %25 = sbr.rel (0) target = $region17
    $region16: #{forward.1} parent=1 // pred_region
      _
    $region17: #{forward.1} parent=1 // pred_fallthru
      _
    // Predicated region
    $region18: #{forward.1} parent=1 // pred_check
      _
    $region19: #{forward.1} parent=1 // pred_check_branch
      %27 = sbr.rel (0) target = $region21
    $region20: #{forward.1} parent=1 // pred_region
      %28 = dma.done [#allocation3], 16
    $region21: #{forward.1} parent=1 // pred_fallthru
      _
    %29 = sfence
    %s30 = sld [smem:[#allocation2]]
    %v31 = vld [vmem:[%s1] sm:$0xff]
    %v32 = vld [vmem:[%s1 + $0x8] sm:$0xff]
    %v33 = vstv %s30
    %v34 = vmul.f32 %v33, %v31
    %v35 = vmul.f32 %v33, %v32
    %s36 = sld [smem:[#allocation2 + $0x1]]
    %v37 = vld [vmem:[%s2] sm:$0xff]
    %v38 = vld [vmem:[%s2 + $0x8] sm:$0xff]
    %v39 = vstv %s36
    %v40 = vmul.f32 %v39, %v37
    %v41 = vmul.f32 %v39, %v38
    %v42 = vadd.f32 %v34, %v40
    %v43 = vadd.f32 %v35, %v41
    %s44 = sld [smem:[#allocation2 + $0x2]]
    %v45 = vld [vmem:[%s3] sm:$0xff]
    %v46 = vld [vmem:[%s3 + $0x8] sm:$0xff]
    %v47 = vstv %s44
    %v48 = vmul.f32 %v47, %v45
    %v49 = vmul.f32 %v47, %v46
    %v50 = vadd.f32 %v42, %v48
    %v51 = vadd.f32 %v43, %v49
    %52 = vst [vmem:[%s4] sm:$0xff] %v50
    %53 = vst [vmem:[%s4 + $0x8] sm:$0xff] %v51
    // Predicated region
    $region22: #{forward.1} parent=1 // pred_check
      _
    $region23: #{forward.1} parent=1 // pred_check_branch
      %55 = sbr.rel (0) target = $region25
    $region24: #{forward.1} parent=1 // pred_region
      _
    $region25: #{forward.1} parent=1 // pred_fallthru
      _
    // Predicated region
    $region26: #{forward.1} parent=1 // pred_check
      _
    $region27: #{forward.1} parent=1 // pred_check_branch
      %57 = sbr.rel (0) target = $region29
    $region28: #{forward.1} parent=1 // pred_region
      _
    $region29: #{forward.1} parent=1 // pred_fallthru
      _
    %58 = vsyncpa [#allocation3], 1

</llo_original>
